<compile_context>
chip_gen: v7x
topology: tpu7x:2x2x1
jax: 0.10.0
libtpu: 0.0.40
codegen_flags: <defaults>
</compile_context>

<pallas_src>
import math

import jax
import jax.numpy as jnp
from jax.experimental import pallas as pl
from jax.experimental.pallas import tpu as pltpu


# ----------------------------------------------------------------------------
# Kernel
# ----------------------------------------------------------------------------
def _zscore_kernel(x_ref, p_ref, o_ref):
    # x_ref / o_ref: (TB, N, D) or (TB, N*D) tile of neuron_weights.
    # p_ref: stacked broadcast parameters; p_ref[0] = mean, p_ref[1] = 1/std
    #        (shape (N, D) or (1, N*D)), same block at every grid step.
    # Pure load -> sub -> mul -> store: all per-element work stays on the
    # 4 VALU slots; nothing else touches the vector store path.
    o_ref[...] = (x_ref[...] - p_ref[0]) * p_ref[1]


# ----------------------------------------------------------------------------
# Generation-aware heuristics
# ----------------------------------------------------------------------------
def _chip_info():
    """Best-effort TPU-generation detection.

    Returns dict with:
      cores          - TensorCores per chip sharing this grid
      target_block   - preferred per-step block size (bytes)
      scoped_default - conservative scoped-VMEM default (bytes)
      vmem_cap       - largest vmem_limit_bytes we are willing to request
    """
    kind = ""
    try:
        kind = (jax.devices()[0].device_kind or "").lower()
    except Exception:
        pass
    if "v7" in kind:
        # 2 TCs/chip, 64 MiB physical VMEM per TC, ~3.2 TB/s HBM: larger blocks
        # to amortize the ~0.35us per-step overhead, headroom under 64 MiB.
        return dict(cores=2, target_block=8 << 20, scoped_default=32 << 20,
                    vmem_cap=56 << 20)
    if any(s in kind for s in ("v5 lite", "v5e", "v5lite")):
        # 1 TC, 128 MiB physical VMEM, 16 MiB scoped default, ~0.8 TB/s HBM:
        # 1-2 MiB blocks already sit at ~85% of the HBM roofline.
        return dict(cores=1, target_block=2 << 20, scoped_default=16 << 20,
                    vmem_cap=96 << 20)
    # v6e / unknown single-TC chip: 128 MiB physical, 32 MiB scoped default.
    return dict(cores=1, target_block=4 << 20, scoped_default=32 << 20,
                vmem_cap=96 << 20)


def _pick_batch_tile(batch, row_bytes, cores, target_block_bytes, sublane_align):
    """Batch rows per grid step.

    Joint constraints:
      * block >= ~1 MiB (or the whole array if smaller) - amortizes the
        per-grid-step overhead / approaches the HBM roofline.
      * on multi-TC chips (v7x) keep >= 2*cores grid steps (>= 2 per TC) so
        the BlockSpec pipeline overlaps DMA with compute on each core; on
        single-TC chips the grid is a sequential loop, so no step floor -
        just maximize the block up to the target.
      * tb divides B (no ragged last block); for the flattened 2D layout tb
        must additionally be a multiple of 8 (sublane tiling) or equal B.
    """
    divisors = [t for t in range(1, batch + 1) if batch % t == 0]
    if sublane_align:
        aligned = [t for t in divisors if t % 8 == 0 or t == batch]
        divisors = aligned or [batch]

    total_bytes = batch * row_bytes
    min_block = min(1 << 20, target_block_bytes, total_bytes)
    min_steps = 2 * cores if cores > 1 else 1

    good = [t for t in divisors
            if t * row_bytes >= min_block and batch // t >= min_steps]
    pool = good or divisors
    under = [t for t in pool if t * row_bytes <= target_block_bytes]
    return max(under) if under else min(pool)


# ----------------------------------------------------------------------------
# pallas_call builder
# ----------------------------------------------------------------------------
def _build_call(x_shape, p_shape, dtype, tb, info, donate_input):
    grid = x_shape[0] // tb
    block_shape = (tb,) + tuple(x_shape[1:])
    tail = len(x_shape) - 1
    p_ndim = len(p_shape)

    def x_map(b, _tail=tail):
        return (b,) + (0,) * _tail

    def p_map(b, _nd=p_ndim):
        # Constant index_map: same parameter block every step (not re-DMA'd).
        return (0,) * _nd

    itemsize = jnp.dtype(dtype).itemsize
    block_bytes = tb * math.prod(x_shape[1:]) * itemsize
    param_bytes = math.prod(p_shape) * itemsize
    # Double-buffered in/out blocks + (double-buffer-allocated) params.
    live_bytes = 4 * block_bytes + 2 * param_bytes

    compiler_kwargs = dict(dimension_semantics=("parallel",))
    # TODO(synk): on v7x, confirm via profile that the batch axis splits across
    # both TensorCores under "parallel"; otherwise switch to CORE_PARALLEL.
    if live_bytes > info["scoped_default"] - (2 << 20):
        compiler_kwargs["vmem_limit_bytes"] = min(
            int(live_bytes * 1.25) + (1 << 20), info["vmem_cap"]
        )

    return pl.pallas_call(
        _zscore_kernel,
        out_shape=jax.ShapeDtypeStruct(x_shape, dtype),
        grid_spec=pltpu.PrefetchScalarGridSpec(
            num_scalar_prefetch=0,
            grid=(grid,),
            in_specs=[
                # neuron_weights: tb batch rows per step, full trailing dims
                # (always satisfies the (8,128) rule, lane-dense last dim).
                pl.BlockSpec(block_shape, x_map),
                # Stacked broadcast parameters [mean; 1/std].
                pl.BlockSpec(tuple(p_shape), p_map),
            ],
            out_specs=pl.BlockSpec(block_shape, x_map),
        ),
        compiler_params=pltpu.CompilerParams(**compiler_kwargs),
        input_output_aliases=({0: 0} if donate_input else {}),
    )


# ----------------------------------------------------------------------------
# Public wrapper (ZScore3D.forward)
# ----------------------------------------------------------------------------
def zscore3d_forward(neuron_weights, neuron_means, neuron_stds, last_bias,
                     *, target_block_bytes=None, donate_input=False):
    """Pallas implementation of ZScore3D.forward."""
    B, N, D = neuron_weights.shape
    assert neuron_means.shape == (N, D)
    assert neuron_stds.shape == (N, D)

    dtype = neuron_weights.dtype
    itemsize = jnp.dtype(dtype).itemsize

    # Hoist the divide out of the per-element path: 1/std is only [N, D]
    # (amortized over B).  Compute in float32 for accuracy, stack with the mean
    # into a single (2, N, D) parameter array (one input stream instead of two).
    inv_stds = 1.0 / neuron_stds.astype(jnp.float32)
    params = jnp.stack(
        [neuron_means.astype(jnp.float32), inv_stds]).astype(dtype)

    info = _chip_info()
    if target_block_bytes is None:
        target_block_bytes = info["target_block"]
    # Never target a block so large that 4x block + params overflows the cap.
    param_bytes = 2 * N * D * itemsize
    target_block_bytes = max(
        N * D * itemsize,
        min(int(target_block_bytes), (info["vmem_cap"] - 2 * param_bytes) // 4),
    )

    lane_dense_3d = (D % 128 == 0)
    if lane_dense_3d:
        x = neuron_weights                      # last dim already lane-dense
        p = params                              # (2, N, D)
    else:
        # Flatten trailing dims so the output last dim is wide (full extent):
        # unmasked lane-dense stores instead of masked vst.msk for D % 128 != 0.
        x = neuron_weights.reshape(B, N * D)
        p = params.reshape(2, 1, N * D)

    row_bytes = N * D * itemsize
    tb = _pick_batch_tile(B, row_bytes, info["cores"], target_block_bytes,
                          sublane_align=not lane_dense_3d)

    call = _build_call(x.shape, p.shape, dtype, tb, info, donate_input)
    out = call(x, p)
    if not lane_dense_3d:
        out = out.reshape(B, N, D)

    # last_bias is returned unchanged (pure pass-through in the reference).
    return out, last_bias


# ----------------------------------------------------------------------------
# Self-test
# ----------------------------------------------------------------------------
if __name__ == "__main__":
    key = jax.random.PRNGKey(0)
    k1, k2, k3, k4, k5, k6, k7 = jax.random.split(key, 7)

    # Case 1: D multiple of 128 -> 3D lane-dense path.  A small explicit block
    # target forces a multi-step grid so BlockSpec pipelining is exercised.
    B, N, D = 16, 32, 128
    Db = 8
    w = jax.random.normal(k1, (B, N, D), dtype=jnp.float32)
    means = jax.random.normal(k2, (N, D), dtype=jnp.float32)
    stds = jnp.abs(jax.random.normal(k3, (N, D), dtype=jnp.float32)) + 0.5
    bias = jax.random.normal(k4, (B, Db), dtype=jnp.float32)

    out_w, out_b = zscore3d_forward(
        w, means, stds, bias, target_block_bytes=128 * 1024
    )
    jax.block_until_ready((out_w, out_b))
    ref = (w - means[None]) / stds[None]
    assert jnp.allclose(out_w, ref, atol=1e-5, rtol=1e-5)
    assert jnp.array_equal(out_b, bias)

    # Case 2: D not a multiple of 128 -> flattened lane-dense 2D path.
    B2, N2, D2 = 8, 33, 96
    w2 = jax.random.normal(k5, (B2, N2, D2), dtype=jnp.float32)
    means2 = jax.random.normal(k6, (N2, D2), dtype=jnp.float32)
    stds2 = jnp.abs(jax.random.normal(k7, (N2, D2), dtype=jnp.float32)) + 0.5
    bias2 = jnp.zeros((B2, 4), dtype=jnp.float32)

    out_w2, out_b2 = zscore3d_forward(w2, means2, stds2, bias2)
    jax.block_until_ready((out_w2, out_b2))
    ref2 = (w2 - means2[None]) / stds2[None]
    assert jnp.allclose(out_w2, ref2, atol=1e-5, rtol=1e-5)
    assert jnp.array_equal(out_b2, bias2)

    print("KERNEL_OK")
</pallas_src>

<mosaic_0001>
module attributes {stable_mosaic.version = 11 : i64} {
  func.func @_zscore_kernel(%arg0: i32, %arg1: memref<8x32x128xf32, #tpu.memory_space<vmem>>, %arg2: memref<2x32x128xf32, #tpu.memory_space<vmem>>, %arg3: memref<8x32x128xf32, #tpu.memory_space<vmem>>) attributes {dimension_semantics = [#tpu.dimension_semantics<parallel>], iteration_bounds = array<i64: 2>, scalar_prefetch = 0 : i64, scratch_operands = 0 : i64, tpu.core_type = #tpu.core_type<tc>, window_params = [{transform_indices = @transform_0, window_bounds = array<i64: 8, 32, 128>}, {pipeline_mode = #tpu.pipeline_mode<synchronous>, transform_indices = @transform_1, window_bounds = array<i64: 2, 32, 128>}, {transform_indices = @transform_2, window_bounds = array<i64: 8, 32, 128>}]} {
    %c0 = arith.constant 0 : index
    %c0_0 = arith.constant 0 : index
    %c0_1 = arith.constant 0 : index
    %0 = vector.load %arg1[%c0, %c0_0, %c0_1] : memref<8x32x128xf32, #tpu.memory_space<vmem>>, vector<8x32x128xf32>
    %c0_2 = arith.constant 0 : index
    %c0_3 = arith.constant 0 : index
    %c0_4 = arith.constant 0 : index
    %1 = vector.load %arg2[%c0_2, %c0_3, %c0_4] : memref<2x32x128xf32, #tpu.memory_space<vmem>>, vector<1x32x128xf32>
    %2 = vector.shape_cast %1 : vector<1x32x128xf32> to vector<32x128xf32>
    %3 = vector.shape_cast %2 : vector<32x128xf32> to vector<1x32x128xf32>
    %4 = vector.broadcast %3 : vector<1x32x128xf32> to vector<8x32x128xf32>
    %5 = arith.subf %0, %4 : vector<8x32x128xf32>
    %c1 = arith.constant 1 : index
    %c0_5 = arith.constant 0 : index
    %c0_6 = arith.constant 0 : index
    %6 = vector.load %arg2[%c1, %c0_5, %c0_6] : memref<2x32x128xf32, #tpu.memory_space<vmem>>, vector<1x32x128xf32>
    %7 = vector.shape_cast %6 : vector<1x32x128xf32> to vector<32x128xf32>
    %8 = vector.shape_cast %7 : vector<32x128xf32> to vector<1x32x128xf32>
    %9 = vector.broadcast %8 : vector<1x32x128xf32> to vector<8x32x128xf32>
    %10 = arith.mulf %5, %9 : vector<8x32x128xf32>
    %c0_7 = arith.constant 0 : index
    %c0_8 = arith.constant 0 : index
    %c0_9 = arith.constant 0 : index
    %11 = vector.load %arg3[%c0_7, %c0_8, %c0_9] : memref<8x32x128xf32, #tpu.memory_space<vmem>>, vector<8x32x128xf32>
    tpu.vector_store %arg3[%c0_7, %c0_8, %c0_9], %10 {strides = array<i32>} : memref<8x32x128xf32, #tpu.memory_space<vmem>>, vector<8x32x128xf32>,
    return
  }
  func.func @transform_0(%arg0: i32) -> (i32, i32, i32) {
    %c0_i32 = arith.constant 0 : i32
    %c0_i32_0 = arith.constant 0 : i32
    %c0_i32_1 = arith.constant 0 : i32
    return %arg0, %c0_i32, %c0_i32_0 : i32, i32, i32
  }
  func.func @transform_1(%arg0: i32) -> (i32, i32, i32) {
    %c0_i32 = arith.constant 0 : i32
    %c0_i32_0 = arith.constant 0 : i32
    %c0_i32_1 = arith.constant 0 : i32
    %c0_i32_2 = arith.constant 0 : i32
    return %c0_i32, %c0_i32_0, %c0_i32_1 : i32, i32, i32
  }
  func.func @transform_2(%arg0: i32) -> (i32, i32, i32) {
    %c0_i32 = arith.constant 0 : i32
    %c0_i32_0 = arith.constant 0 : i32
    %c0_i32_1 = arith.constant 0 : i32
    return %arg0, %c0_i32, %c0_i32_0 : i32, i32, i32
  }
}

</mosaic_0001>

<llo_original>
// kernel: tpu_custom_call.1
$region0: #{tpu_custom_call.1}
  #allocation0 [shape = 'u32[]', space=smem, size = 0x4, offset = 0x4, fixed_abs, tag = 'smem constant byte address 0x4 - core index']
  #allocation1 [shape = 'u32[144,128]{1,0:T(1,128)}', space=vmem, size = 0x12000, scoped, tag = 'internal scratch']
  %s0 = inlined_call_operand.hbm [shape: f32[16,32,128], index: 0, kind: input, shape index: {}]
  %s1 = inlined_call_operand.hbm [shape: f32[2,32,128], index: 1, kind: input, shape index: {}]
  %s2 = inlined_call_operand.hbm [shape: f32[16,32,128], index: 2, kind: output, shape index: {}]
  %s3 = sld [smem:[#allocation0]]
  $region49: #{tpu_custom_call.1} parent=0
    _
  %s5 = ssub.s32 1, %s3
  %s6 = scalar_select 0, %s5, %s3
  $region1: #{tpu_custom_call.1} parent=0
    #allocation2 [shape = 'u8[262144]{0}', space=vmem, size = 0x40000, scoped, tag = 'input window, operand 0']
    #allocation3 [shape = 's32[2]{0}', space=sflag, size = 0x8, scoped, tag = 'scoped memory for tpu_custom_call.1']
    #allocation4 [shape = 's32[2]{0}', space=sflag, size = 0x8, scoped, tag = 'scoped memory for tpu_custom_call.1']
    #allocation5 [shape = 'u8[32768]{0}', space=vmem, size = 0x8000, scoped, tag = 'input window, operand 1, single buffered']
    #allocation6 [shape = 's32[1]{0}', space=sflag, size = 0x4, scoped, tag = 'scoped memory for tpu_custom_call.1']
    #allocation7 [shape = 'u8[262144]{0}', space=vmem, size = 0x40000, scoped, tag = 'output window, operand 0']
    %7 = vsyncpa [#allocation3], 0
    %s8 = scalar_lea.sflag [#allocation3], 1
    %9 = vsyncpa %s8, 0
    %10 = vsyncpa [#allocation6], 0
    %11 = vsyncpa [#allocation4], 0
    %s12 = scalar_lea.sflag [#allocation4], 1
    %13 = vsyncpa %s12, 0
    loop: start=0, step=1, limit=4
    $region2: #{tpu_custom_call.1} parent=1 // loop_pre_header
      _
    $region3: #{tpu_custom_call.1} parent=1 // loop_header
      %s15 = sphi 0, %s19
      %p16 = scmp.ge.s32.totalorder %s15, 4
      %s25 = sphi 0, %s27
      %s28 = sphi 0, %s25
      %s29 = sphi 0, %s28
      %s45 = sphi 0, %s29
      %s49 = sphi 0, %s49
      %s51 = sphi 0, %s49
      %s52 = sphi 0, %s51
      %s66 = sphi 0, %s52
      %s72 = sphi 0, %s74
      %s75 = sphi 0, %s72
      %s76 = sphi 0, %s75
      %s92 = sphi 0, %s76
    $region4: #{tpu_custom_call.1} parent=1 // loop_header_branch
      %18 = sbr.rel (%p16) target = $region8
    $region5: #{tpu_custom_call.1} parent=1 // loop_body
      %s20 = ssub.s32 %s15, 1
      %s21 = ssub.s32 %s15, 2
      %s22 = sadd.s32 %s15, 1
      %s23 = ssub.s32 %s15, %s22
      %p24 = scmp.eq.s32.totalorder %s23, 0
      %s26 = sadd.s32 %s25, 1
      %s27 = scalar_select %p24, %s25, %s26
      %p30 = pneg %p24
      %p31 = scmp.eq.s32.totalorder %s15, 1
      %p32 = por %p30, %p31
      %p33 = scmp.ne.s32.totalorder %s25, %s28
      %p34 = scmp.eq.s32.totalorder %s15, 0
      %p35 = por %p33, %p34
      %p36 = scmp.ne.s32.totalorder %s25, %s28
      %p37 = scmp.eq.s32.totalorder %s20, 1
      %p38 = por %p36, %p37
      %p39 = scmp.ne.s32.totalorder %s28, %s29
      %p40 = scmp.eq.s32.totalorder %s20, 0
      %p41 = por %p39, %p40
      %p42 = scmp.ne.s32.totalorder %s28, %s29
      %p43 = scmp.eq.s32.totalorder %s21, 1
      %p44 = por %p42, %p43
      %p46 = scmp.ne.s32.totalorder %s29, %s45
      %p47 = scmp.eq.s32.totalorder %s21, 0
      %p48 = por %p46, %p47
      %s50 = sadd.s32 %s49, 1
      %p53 = scmp.eq.s32.totalorder %s15, 1
      %p54 = scmp.ne.s32.totalorder %s49, %s51
      %p55 = scmp.eq.s32.totalorder %s15, 0
      %p56 = por %p54, %p55
      %p57 = scmp.ne.s32.totalorder %s49, %s51
      %p58 = scmp.eq.s32.totalorder %s20, 1
      %p59 = por %p57, %p58
      %p60 = scmp.ne.s32.totalorder %s51, %s52
      %p61 = scmp.eq.s32.totalorder %s20, 0
      %p62 = por %p60, %p61
      %p63 = scmp.ne.s32.totalorder %s51, %s52
      %p64 = scmp.eq.s32.totalorder %s21, 1
      %p65 = por %p63, %p64
      %p67 = scmp.ne.s32.totalorder %s52, %s66
      %p68 = scmp.eq.s32.totalorder %s21, 0
      %p69 = por %p67, %p68
      %s70 = ssub.s32 %s15, %s22
      %p71 = scmp.eq.s32.totalorder %s70, 0
      %s73 = sadd.s32 %s72, 1
      %s74 = scalar_select %p71, %s72, %s73
      %p77 = pneg %p71
      %p78 = scmp.eq.s32.totalorder %s15, 1
      %p79 = por %p77, %p78
      %p80 = scmp.ne.s32.totalorder %s72, %s75
      %p81 = scmp.eq.s32.totalorder %s15, 0
      %p82 = por %p80, %p81
      %p83 = scmp.ne.s32.totalorder %s72, %s75
      %p84 = scmp.eq.s32.totalorder %s20, 1
      %p85 = por %p83, %p84
      %p86 = scmp.ne.s32.totalorder %s75, %s76
      %p87 = scmp.eq.s32.totalorder %s20, 0
      %p88 = por %p86, %p87
      %p89 = scmp.ne.s32.totalorder %s75, %s76
      %p90 = scmp.eq.s32.totalorder %s21, 1
      %p91 = por %p89, %p90
      %p93 = scmp.ne.s32.totalorder %s76, %s92
      %p94 = scmp.eq.s32.totalorder %s21, 0
      %p95 = por %p93, %p94
      %p96 = scmp.le.s32.totalorder 1, %s15
      %p97 = scmp.lt.s32.totalorder %s15, 3
      %p98 = pnand %p96, %p97
      %p99 = pneg %p98
      // Predicated region
      $region9: #{tpu_custom_call.1} parent=5 // pred_check
        _
      $region10: #{tpu_custom_call.1} parent=5 // pred_check_branch
        %101 = sbr.rel (%p98) target = $region12
      $region11: #{tpu_custom_call.1} parent=5 // pred_region
        %s102 = ssub.s32 %s15, 1
        // Predicated region
        $region13: #{tpu_custom_call.1} parent=11 // pred_check
          %p103 = pneg %p62
        $region14: #{tpu_custom_call.1} parent=11 // pred_check_branch
          %105 = sbr.rel (%p103) target = $region16
        $region15: #{tpu_custom_call.1} parent=11 // pred_region
          %s107 = ssub.s32 1024, 1024
          %108 = vsyncadd [#allocation6], %s107
          %s109 = sshll.u32 [#allocation5], 4
          %s110 = int_to_ptr.vmem [resolvable:$true] %s109
          %115 = dma.hbm_to_vmem [thread:$0]  %s1, 1024, %s110, [#allocation6], 128, 128, 8
        $region16: #{tpu_custom_call.1} parent=11 // pred_fallthru
          _
      $region12: #{tpu_custom_call.1} parent=5 // pred_fallthru
        _
      %p116 = scmp.lt.s32.totalorder %s15, 2
      // Predicated region
      $region17: #{tpu_custom_call.1} parent=5 // pred_check
        %p117 = pneg %p116
      $region18: #{tpu_custom_call.1} parent=5 // pred_check_branch
        %119 = sbr.rel (%p117) target = $region20
      $region19: #{tpu_custom_call.1} parent=5 // pred_region
        // Predicated region
        $region21: #{tpu_custom_call.1} parent=19 // pred_check
          %p120 = pneg %p35
        $region22: #{tpu_custom_call.1} parent=19 // pred_check_branch
          %122 = sbr.rel (%p120) target = $region24
        $region23: #{tpu_custom_call.1} parent=19 // pred_region
          %s123 = sand.u32 %s25, 1
          %s124 = scalar_lea.sflag [#allocation3], %s123
          %s125 = sand.u32 %s25, 1
          %s126 = smul.addr %s125, 256
          %s127 = scalar_lea.vmem [#allocation2], %s126
          %s128 = smul.u32 8, %s15
          %s130 = ssub.s32 4096, 4096
          %131 = vsyncadd %s124, %s130
          %s132 = smul.addr %s128, 4
          %s133 = smul.addr %s132, 128
          %s134 = scalar_lea.hbm %s0, %s133
          %s135 = sshll.u32 %s127, 4
          %s136 = int_to_ptr.vmem [resolvable:$true] %s135
          %141 = dma.hbm_to_vmem [thread:$0]  %s134, 4096, %s136, %s124, 128, 128, 8
        $region24: #{tpu_custom_call.1} parent=19 // pred_fallthru
          _
      $region20: #{tpu_custom_call.1} parent=5 // pred_fallthru
        _
      %p142 = scmp.le.s32.totalorder 1, %s15
      %p143 = scmp.lt.s32.totalorder %s15, 3
      %p144 = pnand %p142, %p143
      %p145 = pneg %p144
      // Predicated region
      $region25: #{tpu_custom_call.1} parent=5 // pred_check
        _
      $region26: #{tpu_custom_call.1} parent=5 // pred_check_branch
        %147 = sbr.rel (%p144) target = $region28
      $region27: #{tpu_custom_call.1} parent=5 // pred_region
        %s148 = ssub.s32 %s15, 1
        %s149 = sand.u32 %s28, 1
        %s150 = scalar_lea.sflag [#allocation3], %s149
        %s151 = sand.u32 %s28, 1
        %s152 = smul.addr %s151, 256
        %s153 = scalar_lea.vmem [#allocation2], %s152
        // Predicated region
        $region29: #{tpu_custom_call.1} parent=27 // pred_check
          %p154 = pneg %p41
        $region30: #{tpu_custom_call.1} parent=27 // pred_check_branch
          %156 = sbr.rel (%p154) target = $region32
        $region31: #{tpu_custom_call.1} parent=27 // pred_region
          %157 = dma.done %s150, 4096
        $region32: #{tpu_custom_call.1} parent=27 // pred_fallthru
          _
        // Predicated region
        $region33: #{tpu_custom_call.1} parent=27 // pred_check
          %p158 = pneg %p62
        $region34: #{tpu_custom_call.1} parent=27 // pred_check_branch
          %160 = sbr.rel (%p158) target = $region36
        $region35: #{tpu_custom_call.1} parent=27 // pred_region
          %161 = dma.done [#allocation6], 1024
        $region36: #{tpu_custom_call.1} parent=27 // pred_fallthru
          _
        %s162 = sand.u32 %s28, 1
        %s163 = scalar_lea.sflag [#allocation3], %s162
        %s164 = sand.u32 %s28, 1
        %s165 = smul.addr %s164, 256
        %s166 = scalar_lea.vmem [#allocation2], %s165
        %p167 = pneg %p41
        %p168 = pneg %p38
        %p169 = pneg %p62
        %p170 = pneg %p59
        %p171 = pneg %p88
        %p172 = pneg %p85
        %s173 = sand.u32 %s75, 1
        %s174 = scalar_lea.sflag [#allocation4], %s173
        %s175 = sand.u32 %s75, 1
        %s176 = smul.addr %s175, 256
        %s177 = scalar_lea.vmem [#allocation7], %s176
        %s178 = smul.u32 8, %s20
        %s179 = smul.u32 8, %s20
        %v180 = vld [vmem:[%s153] sm:$0xff]
        %v181 = vld [vmem:[%s153 + $0x8] sm:$0xff]
        %v182 = vld [vmem:[%s153 + $0x10] sm:$0xff]
        %v183 = vld [vmem:[%s153 + $0x18] sm:$0xff]
        %v184 = vld [vmem:[%s153 + $0x20] sm:$0xff]
        %v185 = vld [vmem:[%s153 + $0x28] sm:$0xff]
        %v186 = vld [vmem:[%s153 + $0x30] sm:$0xff]
        %v187 = vld [vmem:[%s153 + $0x38] sm:$0xff]
        %v188 = vld [vmem:[%s153 + $0x40] sm:$0xff]
        %v189 = vld [vmem:[%s153 + $0x48] sm:$0xff]
        %v190 = vld [vmem:[%s153 + $0x50] sm:$0xff]
        %v191 = vld [vmem:[%s153 + $0x58] sm:$0xff]
        %v192 = vld [vmem:[%s153 + $0x60] sm:$0xff]
        %v193 = vld [vmem:[%s153 + $0x68] sm:$0xff]
        %v194 = vld [vmem:[%s153 + $0x70] sm:$0xff]
        %v195 = vld [vmem:[%s153 + $0x78] sm:$0xff]
        %v196 = vld [vmem:[%s153 + $0x80] sm:$0xff]
        %v197 = vld [vmem:[%s153 + $0x88] sm:$0xff]
        %v198 = vld [vmem:[%s153 + $0x90] sm:$0xff]
        %v199 = vld [vmem:[%s153 + $0x98] sm:$0xff]
        %v200 = vld [vmem:[%s153 + $0xa0] sm:$0xff]
        %v201 = vld [vmem:[%s153 + $0xa8] sm:$0xff]
        %v202 = vld [vmem:[%s153 + $0xb0] sm:$0xff]
        %v203 = vld [vmem:[%s153 + $0xb8] sm:$0xff]
        %v204 = vld [vmem:[%s153 + $0xc0] sm:$0xff]
        %v205 = vld [vmem:[%s153 + $0xc8] sm:$0xff]
        %v206 = vld [vmem:[%s153 + $0xd0] sm:$0xff]
        %v207 = vld [vmem:[%s153 + $0xd8] sm:$0xff]
        %v208 = vld [vmem:[%s153 + $0xe0] sm:$0xff]
        %v209 = vld [vmem:[%s153 + $0xe8] sm:$0xff]
        %v210 = vld [vmem:[%s153 + $0xf0] sm:$0xff]
        %v211 = vld [vmem:[%s153 + $0xf8] sm:$0xff]
        %v212 = vld [vmem:[#allocation5] sm:$0xff]
        %v213 = vld [vmem:[#allocation5 + $0x8] sm:$0xff]
        %v214 = vld [vmem:[#allocation5 + $0x10] sm:$0xff]
        %v215 = vld [vmem:[#allocation5 + $0x18] sm:$0xff]
        %v216 = vsub.f32 %v180, %v212
        %v217 = vsub.f32 %v181, %v213
        %v218 = vsub.f32 %v182, %v214
        %v219 = vsub.f32 %v183, %v215
        %v220 = vsub.f32 %v184, %v212
        %v221 = vsub.f32 %v185, %v213
        %v222 = vsub.f32 %v186, %v214
        %v223 = vsub.f32 %v187, %v215
        %v224 = vsub.f32 %v188, %v212
        %v225 = vsub.f32 %v189, %v213
        %v226 = vsub.f32 %v190, %v214
        %v227 = vsub.f32 %v191, %v215
        %v228 = vsub.f32 %v192, %v212
        %v229 = vsub.f32 %v193, %v213
        %v230 = vsub.f32 %v194, %v214
        %v231 = vsub.f32 %v195, %v215
        %v232 = vsub.f32 %v196, %v212
        %v233 = vsub.f32 %v197, %v213
        %v234 = vsub.f32 %v198, %v214
        %v235 = vsub.f32 %v199, %v215
        %v236 = vsub.f32 %v200, %v212
        %v237 = vsub.f32 %v201, %v213
        %v238 = vsub.f32 %v202, %v214
        %v239 = vsub.f32 %v203, %v215
        %v240 = vsub.f32 %v204, %v212
        %v241 = vsub.f32 %v205, %v213
        %v242 = vsub.f32 %v206, %v214
        %v243 = vsub.f32 %v207, %v215
        %v244 = vsub.f32 %v208, %v212
        %v245 = vsub.f32 %v209, %v213
        %v246 = vsub.f32 %v210, %v214
        %v247 = vsub.f32 %v211, %v215
        %s248 = scalar_lea.vmem [#allocation5], 32
        %v249 = vld [vmem:[%s248] sm:$0xff]
        %v250 = vld [vmem:[%s248 + $0x8] sm:$0xff]
        %v251 = vld [vmem:[%s248 + $0x10] sm:$0xff]
        %v252 = vld [vmem:[%s248 + $0x18] sm:$0xff]
        %v253 = vmul.f32 %v216, %v249
        %v254 = vmul.f32 %v217, %v250
        %v255 = vmul.f32 %v218, %v251
        %v256 = vmul.f32 %v219, %v252
        %v257 = vmul.f32 %v220, %v249
        %v258 = vmul.f32 %v221, %v250
        %v259 = vmul.f32 %v222, %v251
        %v260 = vmul.f32 %v223, %v252
        %v261 = vmul.f32 %v224, %v249
        %v262 = vmul.f32 %v225, %v250
        %v263 = vmul.f32 %v226, %v251
        %v264 = vmul.f32 %v227, %v252
        %v265 = vmul.f32 %v228, %v249
        %v266 = vmul.f32 %v229, %v250
        %v267 = vmul.f32 %v230, %v251
        %v268 = vmul.f32 %v231, %v252
        %v269 = vmul.f32 %v232, %v249
        %v270 = vmul.f32 %v233, %v250
        %v271 = vmul.f32 %v234, %v251
        %v272 = vmul.f32 %v235, %v252
        %v273 = vmul.f32 %v236, %v249
        %v274 = vmul.f32 %v237, %v250
        %v275 = vmul.f32 %v238, %v251
        %v276 = vmul.f32 %v239, %v252
        %v277 = vmul.f32 %v240, %v249
        %v278 = vmul.f32 %v241, %v250
        %v279 = vmul.f32 %v242, %v251
        %v280 = vmul.f32 %v243, %v252
        %v281 = vmul.f32 %v244, %v249
        %v282 = vmul.f32 %v245, %v250
        %v283 = vmul.f32 %v246, %v251
        %v284 = vmul.f32 %v247, %v252
        %285 = vst [vmem:[%s177] sm:$0xff] %v253
        %286 = vst [vmem:[%s177 + $0x8] sm:$0xff] %v254
        %287 = vst [vmem:[%s177 + $0x10] sm:$0xff] %v255
        %288 = vst [vmem:[%s177 + $0x18] sm:$0xff] %v256
        %289 = vst [vmem:[%s177 + $0x20] sm:$0xff] %v257
        %290 = vst [vmem:[%s177 + $0x28] sm:$0xff] %v258
        %291 = vst [vmem:[%s177 + $0x30] sm:$0xff] %v259
        %292 = vst [vmem:[%s177 + $0x38] sm:$0xff] %v260
        %293 = vst [vmem:[%s177 + $0x40] sm:$0xff] %v261
        %294 = vst [vmem:[%s177 + $0x48] sm:$0xff] %v262
        %295 = vst [vmem:[%s177 + $0x50] sm:$0xff] %v263
        %296 = vst [vmem:[%s177 + $0x58] sm:$0xff] %v264
        %297 = vst [vmem:[%s177 + $0x60] sm:$0xff] %v265
        %298 = vst [vmem:[%s177 + $0x68] sm:$0xff] %v266
        %299 = vst [vmem:[%s177 + $0x70] sm:$0xff] %v267
        %300 = vst [vmem:[%s177 + $0x78] sm:$0xff] %v268
        %301 = vst [vmem:[%s177 + $0x80] sm:$0xff] %v269
        %302 = vst [vmem:[%s177 + $0x88] sm:$0xff] %v270
        %303 = vst [vmem:[%s177 + $0x90] sm:$0xff] %v271
        %304 = vst [vmem:[%s177 + $0x98] sm:$0xff] %v272
        %305 = vst [vmem:[%s177 + $0xa0] sm:$0xff] %v273
        %306 = vst [vmem:[%s177 + $0xa8] sm:$0xff] %v274
        %307 = vst [vmem:[%s177 + $0xb0] sm:$0xff] %v275
        %308 = vst [vmem:[%s177 + $0xb8] sm:$0xff] %v276
        %309 = vst [vmem:[%s177 + $0xc0] sm:$0xff] %v277
        %310 = vst [vmem:[%s177 + $0xc8] sm:$0xff] %v278
        %311 = vst [vmem:[%s177 + $0xd0] sm:$0xff] %v279
        %312 = vst [vmem:[%s177 + $0xd8] sm:$0xff] %v280
        %313 = vst [vmem:[%s177 + $0xe0] sm:$0xff] %v281
        %314 = vst [vmem:[%s177 + $0xe8] sm:$0xff] %v282
        %315 = vst [vmem:[%s177 + $0xf0] sm:$0xff] %v283
        %316 = vst [vmem:[%s177 + $0xf8] sm:$0xff] %v284
        %s317 = sand.u32 %s75, 1
        %s318 = scalar_lea.sflag [#allocation4], %s317
        %s319 = sand.u32 %s75, 1
        %s320 = smul.addr %s319, 256
        %s321 = scalar_lea.vmem [#allocation7], %s320
        // Predicated region
        $region37: #{tpu_custom_call.1} parent=27 // pred_check
          %p322 = pneg %p85
        $region38: #{tpu_custom_call.1} parent=27 // pred_check_branch
          %324 = sbr.rel (%p322) target = $region40
        $region39: #{tpu_custom_call.1} parent=27 // pred_region
          %s325 = smul.u32 8, %s20
          %s327 = ssub.s32 4096, 4096
          %328 = vsyncadd %s318, %s327
          %s329 = smul.addr %s325, 4
          %s330 = smul.addr %s329, 128
          %s331 = scalar_lea.hbm %s2, %s330
          %s332 = sshll.u32 %s321, 4
          %s333 = int_to_ptr.vmem [resolvable:$true] %s332
          %338 = dma.vmem_to_hbm [thread:$0]  %s333, 4096, %s331, %s318, 128, 128, 8
        $region40: #{tpu_custom_call.1} parent=27 // pred_fallthru
          _
      $region28: #{tpu_custom_call.1} parent=5 // pred_fallthru
        _
      %p339 = scmp.le.s32.totalorder 2, %s15
      // Predicated region
      $region41: #{tpu_custom_call.1} parent=5 // pred_check
        %p340 = pneg %p339
      $region42: #{tpu_custom_call.1} parent=5 // pred_check_branch
        %342 = sbr.rel (%p340) target = $region44
      $region43: #{tpu_custom_call.1} parent=5 // pred_region
        %s343 = ssub.s32 %s15, 2
        // Predicated region
        $region45: #{tpu_custom_call.1} parent=43 // pred_check
          %p344 = pneg %p91
        $region46: #{tpu_custom_call.1} parent=43 // pred_check_branch
          %346 = sbr.rel (%p344) target = $region48
        $region47: #{tpu_custom_call.1} parent=43 // pred_region
          %s347 = sand.u32 %s76, 1
          %s348 = scalar_lea.sflag [#allocation4], %s347
          %s349 = sand.u32 %s76, 1
          %s350 = smul.addr %s349, 256
          %s351 = scalar_lea.vmem [#allocation7], %s350
          %352 = dma.done %s348, 4096
        $region48: #{tpu_custom_call.1} parent=43 // pred_fallthru
          _
      $region44: #{tpu_custom_call.1} parent=5 // pred_fallthru
        _
    $region6: #{tpu_custom_call.1} parent=1 // loop_footer
      %s19 = sadd.s32 1, %s15
    $region7: #{tpu_custom_call.1} parent=1 // loop_footer_branch
      %14 = sbr.rel target = $region3
    $region8: #{tpu_custom_call.1} parent=1 // loop_exit
      _
    %353 = vsyncpa [#allocation3], 1
    %s354 = scalar_lea.sflag [#allocation3], 1
    %355 = vsyncpa %s354, 1
    %356 = vsyncpa [#allocation6], 1
    %357 = vsyncpa [#allocation4], 1
    %s358 = scalar_lea.sflag [#allocation4], 1
    %359 = vsyncpa %s358, 1

</llo_original>
